<compile_context>
chip_gen: v5e
topology: v5e:2x2
jax: 0.10.0
libtpu: 0.0.40
codegen_flags: <defaults>
</compile_context>

<pallas_src>
import math

import jax
import jax.numpy as jnp
from jax.experimental import pallas as pl
from jax.experimental.pallas import tpu as pltpu


def _attn_sum_kernel(x_ref, w_ref, o_ref):
    """x_ref: (tb, G*C*E) VMEM; w_ref: (G*C*E, G*E) VMEM (resident); o_ref: (tb, G*E)."""
    o_ref[...] = jnp.dot(
        x_ref[...],
        w_ref[...],
        preferred_element_type=jnp.float32,
        precision=jax.lax.Precision.HIGHEST,
    ).astype(o_ref.dtype)


def _round_up(n, m):
    return (n + m - 1) // m * m


def _pick_pack_factor(B, E):
    """Batch rows packed per 128-lane output row (lane-dense stores)."""
    if E >= 128 or 128 % E != 0:
        return 1
    return max(1, math.gcd(128 // E, B))


def _pick_row_tile(num_rows, row_bytes, min_steps=4):
    """Rows of the grouped x per grid step.

    Targets ~2 MiB of *real* payload per pipeline buffer (HBM-roofline plateau
    on v5e/v6e/v7x) while keeping >= `min_steps` grid steps for large batches
    so the 'parallel' batch axis feeds both v7x TensorCores and keeps the DMA
    pipeline busy.
    """
    target_bytes = 2 << 20
    cap = max(8, (target_bytes // row_bytes) // 8 * 8)
    if num_rows <= 8:
        return num_rows  # single full block (block dim == full dim is legal)
    return min(cap, max(8, _round_up(pl.cdiv(num_rows, min_steps), 8)))


def attention_summation(theta, x, *, tile_rows=None):
    """theta: [1, 1, C], x: [B, C, E] -> [B, E]  (== squeeze(theta @ x, dim=1))."""
    assert theta.shape[2] == x.shape[1], f"Wrong input shape: x {x.shape}"
    B, C, E = x.shape
    dtype = x.dtype
    itemsize = jnp.dtype(dtype).itemsize

    G = _pick_pack_factor(B, E)          # batch rows per 128-lane output row
    Bg, K, N = B // G, G * C * E, G * E

    # Block-diagonal weight folding theta into a single lane-dense matmul:
    #   W[(r*C + c)*E + e, r*E + e] = theta[c]
    theta_vec = theta.reshape(C).astype(jnp.float32)
    blk = jnp.kron(theta_vec[:, None], jnp.eye(E, dtype=jnp.float32))        # (C*E, E)
    w = (jnp.kron(jnp.eye(G, dtype=jnp.float32), blk) if G > 1 else blk).astype(dtype)

    x_g = x.reshape(Bg, K)               # free, contiguous reshape

    tb = _pick_row_tile(Bg, K * itemsize) if tile_rows is None else min(tile_rows, Bg)
    grid = (pl.cdiv(Bg, tb),)

    cost = pl.CostEstimate(
        flops=2 * Bg * K * N,
        transcendentals=0,
        bytes_accessed=itemsize * (Bg * K + Bg * N + K * N),
    )

    out_g = pl.pallas_call(
        _attn_sum_kernel,
        out_shape=jax.ShapeDtypeStruct((Bg, N), dtype),
        grid_spec=pltpu.PrefetchScalarGridSpec(
            num_scalar_prefetch=0,
            grid=grid,
            in_specs=[
                # tb grouped batch rows of x per step: lane-dense contiguous loads.
                pl.BlockSpec((tb, K), lambda b: (b, 0)),
                # theta-derived weight: VMEM-resident, constant index_map -> loaded once.
                pl.BlockSpec((K, N), lambda b: (0, 0)),
            ],
            out_specs=pl.BlockSpec((tb, N), lambda b: (b, 0)),
        ),
        compiler_params=pltpu.CompilerParams(
            dimension_semantics=("parallel",),
        ),
        cost_estimate=cost,
    )(x_g, w)

    return out_g.reshape(B, E)           # free reshape back to [B, E]


def _reference(theta, x):
    # Exact f32 elementwise reference for torch.squeeze(torch.matmul(theta, x), dim=1).
    return (theta.reshape(1, -1, 1) * x).sum(axis=1)


if __name__ == "__main__":
    # Module hyperparameters (small, consistent with the module's forward).
    n_channel = 4
    emb_dim = 32
    batch = 2

    key = jax.random.PRNGKey(0)
    k_x, k_w, k_b, k_u, k_x2, k_t2, k_x3, k_t3 = jax.random.split(key, 8)

    # Deterministic parameter init (shapes from __init__).
    theta = jnp.full((1, 1, n_channel), 1.0 / n_channel, dtype=jnp.float32)
    # w_omega / b_omega / u_omega only feed calc_theta (training-time theta
    # refresh), not forward; built for completeness.
    w_omega = 0.1 * jax.random.normal(k_w, (emb_dim, emb_dim), dtype=jnp.float32)
    b_omega = 0.1 * jax.random.normal(k_b, (emb_dim,), dtype=jnp.float32)
    u_omega = 0.1 * jax.random.normal(k_u, (emb_dim,), dtype=jnp.float32)
    # TODO(synk): calc_theta (tanh/softmax attention over stacked inputs) is a
    # separate non-forward method; not implemented as part of the forward kernel.

    x = jax.random.normal(k_x, (batch, n_channel, emb_dim), dtype=jnp.float32)

    # 1) Module-sized forward (B=2 -> pack factor G=2, single block).
    out = jax.block_until_ready(attention_summation(theta, x))
    assert out.shape == (batch, emb_dim)
    assert jnp.allclose(out, _reference(theta, x), atol=1e-4, rtol=1e-4)

    # 2) Fully lane-packed path (B=24 -> G=4: 128-lane output rows).
    theta2 = jax.random.normal(k_t2, (1, 1, n_channel), dtype=jnp.float32)
    x2 = jax.random.normal(k_x2, (24, n_channel, emb_dim), dtype=jnp.float32)
    out2 = jax.block_until_ready(attention_summation(theta2, x2))
    assert jnp.allclose(out2, _reference(theta2, x2), atol=1e-4, rtol=1e-4)

    # 3) Multi-step grid with partial tail block (B=40 -> Bg=10, tile 8 -> 2 steps).
    x3 = jax.random.normal(k_x3, (40, n_channel, emb_dim), dtype=jnp.float32)
    out3 = jax.block_until_ready(attention_summation(theta2, x3, tile_rows=8))
    assert jnp.allclose(out3, _reference(theta2, x3), atol=1e-4, rtol=1e-4)

    # 4) Fallback when E does not divide 128 (G=1: lane-dense loads, masked stores).
    theta3 = jax.random.normal(k_t3, (1, 1, n_channel), dtype=jnp.float32)
    x4 = jax.random.normal(k_x, (6, n_channel, 48), dtype=jnp.float32)
    out4 = jax.block_until_ready(attention_summation(theta3, x4))
    assert jnp.allclose(out4, _reference(theta3, x4), atol=1e-4, rtol=1e-4)

    print("KERNEL_OK")
</pallas_src>

<mosaic_0001>
module attributes {stable_mosaic.version = 11 : i64} {
  func.func @_attn_sum_kernel(%arg0: i32, %arg1: memref<1x256xf32, #tpu.memory_space<vmem>>, %arg2: memref<256x64xf32, #tpu.memory_space<vmem>>, %arg3: memref<1x64xf32, #tpu.memory_space<vmem>>) attributes {dimension_semantics = [#tpu.dimension_semantics<parallel>], iteration_bounds = array<i64: 1>, scalar_prefetch = 0 : i64, scratch_operands = 0 : i64, tpu.core_type = #tpu.core_type<tc>, window_params = [{transform_indices = @transform_0, window_bounds = array<i64: 1, 256>}, {pipeline_mode = #tpu.pipeline_mode<synchronous>, transform_indices = @transform_1, window_bounds = array<i64: 256, 64>}, {transform_indices = @transform_2, window_bounds = array<i64: 1, 64>}]} {
    %c0 = arith.constant 0 : index
    %c0_0 = arith.constant 0 : index
    %0 = vector.load %arg1[%c0, %c0_0] : memref<1x256xf32, #tpu.memory_space<vmem>>, vector<1x256xf32>
    %c0_1 = arith.constant 0 : index
    %c0_2 = arith.constant 0 : index
    %1 = vector.load %arg2[%c0_1, %c0_2] : memref<256x64xf32, #tpu.memory_space<vmem>>, vector<256x64xf32>
    %cst = arith.constant dense<0.000000e+00> : vector<1x64xf32>
    %2 = tpu.matmul %0, %1, %cst {dimension_numbers = #tpu.dot_dimension_numbers<[1], [0], [0], [1], [0, 0, 1, 1], [], []>, precision = #tpu.contract_precision<fp32>} : vector<1x256xf32>, vector<256x64xf32>, vector<1x64xf32> -> vector<1x64xf32>
    %c0_3 = arith.constant 0 : index
    %c0_4 = arith.constant 0 : index
    %3 = vector.load %arg3[%c0_3, %c0_4] : memref<1x64xf32, #tpu.memory_space<vmem>>, vector<1x64xf32>
    tpu.vector_store %arg3[%c0_3, %c0_4], %2 {strides = array<i32>} : memref<1x64xf32, #tpu.memory_space<vmem>>, vector<1x64xf32>,
    return
  }
  func.func @transform_0(%arg0: i32) -> (i32, i32) {
    %c0_i32 = arith.constant 0 : i32
    %c0_i32_0 = arith.constant 0 : i32
    return %arg0, %c0_i32 : i32, i32
  }
  func.func @transform_1(%arg0: i32) -> (i32, i32) {
    %c0_i32 = arith.constant 0 : i32
    %c0_i32_0 = arith.constant 0 : i32
    %c0_i32_1 = arith.constant 0 : i32
    return %c0_i32, %c0_i32_0 : i32, i32
  }
  func.func @transform_2(%arg0: i32) -> (i32, i32) {
    %c0_i32 = arith.constant 0 : i32
    %c0_i32_0 = arith.constant 0 : i32
    return %arg0, %c0_i32 : i32, i32
  }
}

</mosaic_0001>

<llo_original>
// kernel: tpu_custom_call.1
$region0: #{tpu_custom_call.1}
  #allocation0 [shape = 'u32[]', space=smem, size = 0x4, offset = 0x4, fixed_abs, tag = 'smem constant byte address 0x4 - core index']
  #allocation1 [shape = 'u32[72,128]{1,0:T(1,128)}', space=vmem, size = 0x9000, scoped, tag = 'internal scratch']
  %s0 = inlined_call_operand.vmem [shape: f32[1,256], index: 0, kind: input, shape index: {}]
  %s1 = inlined_call_operand.vmem [shape: f32[256,64], index: 1, kind: input, shape index: {}]
  %s2 = inlined_call_operand.hbm [shape: f32[1,64], index: 2, kind: output, shape index: {}]
  %s3 = sld [smem:[#allocation0]]
  $region18: #{tpu_custom_call.1} parent=0
    _
  %s5 = ssub.s32 1, %s3
  %s6 = scalar_select 0, %s5, %s3
  $region1: #{tpu_custom_call.1} parent=0
    #allocation2 [shape = 'u8[512]{0}', space=vmem, size = 0x400, scoped, tag = 'output window, operand 0, single buffered']
    #allocation3 [shape = 's32[1]{0}', space=sflag, size = 0x4, scoped, tag = 'scoped memory for tpu_custom_call.1']
    %7 = vsyncpa [#allocation3], 0
    // Predicated region
    $region2: #{tpu_custom_call.1} parent=1 // pred_check
      _
    $region3: #{tpu_custom_call.1} parent=1 // pred_check_branch
      %9 = sbr.rel (0) target = $region5
    $region4: #{tpu_custom_call.1} parent=1 // pred_region
      _
    $region5: #{tpu_custom_call.1} parent=1 // pred_fallthru
      _
    // Predicated region
    $region6: #{tpu_custom_call.1} parent=1 // pred_check
      _
    $region7: #{tpu_custom_call.1} parent=1 // pred_check_branch
      %11 = sbr.rel (0) target = $region9
    $region8: #{tpu_custom_call.1} parent=1 // pred_region
      _
    $region9: #{tpu_custom_call.1} parent=1 // pred_fallthru
      _
    %v12 = vld [vmem:[%s0] sm:$0x3]
    %v13 = vld [vmem:[%s1] sm:$0xff]
    %v14 = vld [vmem:[%s1 + $0x8] sm:$0xff]
    %v15 = vld [vmem:[%s1 + $0x10] sm:$0xff]
    %v16 = vld [vmem:[%s1 + $0x18] sm:$0xff]
    %v17 = vld [vmem:[%s1 + $0x20] sm:$0xff]
    %v18 = vld [vmem:[%s1 + $0x28] sm:$0xff]
    %v19 = vld [vmem:[%s1 + $0x30] sm:$0xff]
    %v20 = vld [vmem:[%s1 + $0x38] sm:$0xff]
    %v21 = vld [vmem:[%s1 + $0x40] sm:$0xff]
    %v22 = vld [vmem:[%s1 + $0x48] sm:$0xff]
    %v23 = vld [vmem:[%s1 + $0x50] sm:$0xff]
    %v24 = vld [vmem:[%s1 + $0x58] sm:$0xff]
    %v25 = vld [vmem:[%s1 + $0x60] sm:$0xff]
    %v26 = vld [vmem:[%s1 + $0x68] sm:$0xff]
    %v27 = vld [vmem:[%s1 + $0x70] sm:$0xff]
    %v28 = vld [vmem:[%s1 + $0x78] sm:$0xff]
    %v29 = vld [vmem:[%s1 + $0x80] sm:$0xff]
    %v30 = vld [vmem:[%s1 + $0x88] sm:$0xff]
    %v31 = vld [vmem:[%s1 + $0x90] sm:$0xff]
    %v32 = vld [vmem:[%s1 + $0x98] sm:$0xff]
    %v33 = vld [vmem:[%s1 + $0xa0] sm:$0xff]
    %v34 = vld [vmem:[%s1 + $0xa8] sm:$0xff]
    %v35 = vld [vmem:[%s1 + $0xb0] sm:$0xff]
    %v36 = vld [vmem:[%s1 + $0xb8] sm:$0xff]
    %v37 = vld [vmem:[%s1 + $0xc0] sm:$0xff]
    %v38 = vld [vmem:[%s1 + $0xc8] sm:$0xff]
    %v39 = vld [vmem:[%s1 + $0xd0] sm:$0xff]
    %v40 = vld [vmem:[%s1 + $0xd8] sm:$0xff]
    %v41 = vld [vmem:[%s1 + $0xe0] sm:$0xff]
    %v42 = vld [vmem:[%s1 + $0xe8] sm:$0xff]
    %v43 = vld [vmem:[%s1 + $0xf0] sm:$0xff]
    %v44 = vld [vmem:[%s1 + $0xf8] sm:$0xff]
    %v46 = vperm.slane %v12, 0
    %v47 = vperm.slane %v12, 1
    %v50 = vand.u32 %v28, 4294901760
    %51 = vmatpush.msra.mxu0 %v50
    %v52 = vand.u32 %v27, 4294901760
    %53 = vmatpush.msra.mxu0 %v52
    %v54 = vand.u32 %v26, 4294901760
    %55 = vmatpush.msra.mxu0 %v54
    %v56 = vand.u32 %v25, 4294901760
    %57 = vmatpush.msra.mxu0 %v56
    %v58 = vand.u32 %v24, 4294901760
    %59 = vmatpush.msra.mxu0 %v58
    %v60 = vand.u32 %v23, 4294901760
    %61 = vmatpush.msra.mxu0 %v60
    %v62 = vand.u32 %v22, 4294901760
    %63 = vmatpush.msra.mxu0 %v62
    %v64 = vand.u32 %v21, 4294901760
    %65 = vmatpush.msra.mxu0 %v64
    %v66 = vand.u32 %v20, 4294901760
    %67 = vmatpush.msra.mxu0 %v66
    %v68 = vand.u32 %v19, 4294901760
    %69 = vmatpush.msra.mxu0 %v68
    %v70 = vand.u32 %v18, 4294901760
    %71 = vmatpush.msra.mxu0 %v70
    %v72 = vand.u32 %v17, 4294901760
    %73 = vmatpush.msra.mxu0 %v72
    %v74 = vand.u32 %v16, 4294901760
    %75 = vmatpush.msra.mxu0 %v74
    %v76 = vand.u32 %v15, 4294901760
    %77 = vmatpush.msra.mxu0 %v76
    %v78 = vand.u32 %v14, 4294901760
    %79 = vmatpush.msra.mxu0 %v78
    %v80 = vand.u32 %v13, 4294901760
    %81 = vmatpush.msra.mxu0 %v80
    %v82 = vand.u32 %v46, 4294901760
    %v83 = vsub.f32 %v46, %v82
    %v84 = vand.u32 %v83, 4294901760
    %v85 = vsub.f32 %v83, %v84
    %v86 = vand.u32 %v85, 4294901760
    %87 = vmatmul.f32.gmra.mxu0 %v86
    %v88 = vpop.f32.mrf.mxu0
    %v89 = vadd.f32 0.0, %v88
    %90 = vdwg.mxu0
    %v91 = vand.u32 %v28, 4294901760
    %v92 = vsub.f32 %v28, %v91
    %v93 = vand.u32 %v92, 4294901760
    %v94 = vsub.f32 %v92, %v93
    %v95 = vand.u32 %v94, 4294901760
    %96 = vmatpush.msra.mxu0 %v95
    %v97 = vand.u32 %v27, 4294901760
    %v98 = vsub.f32 %v27, %v97
    %v99 = vand.u32 %v98, 4294901760
    %v100 = vsub.f32 %v98, %v99
    %v101 = vand.u32 %v100, 4294901760
    %102 = vmatpush.msra.mxu0 %v101
    %v103 = vand.u32 %v26, 4294901760
    %v104 = vsub.f32 %v26, %v103
    %v105 = vand.u32 %v104, 4294901760
    %v106 = vsub.f32 %v104, %v105
    %v107 = vand.u32 %v106, 4294901760
    %108 = vmatpush.msra.mxu0 %v107
    %v109 = vand.u32 %v25, 4294901760
    %v110 = vsub.f32 %v25, %v109
    %v111 = vand.u32 %v110, 4294901760
    %v112 = vsub.f32 %v110, %v111
    %v113 = vand.u32 %v112, 4294901760
    %114 = vmatpush.msra.mxu0 %v113
    %v115 = vand.u32 %v24, 4294901760
    %v116 = vsub.f32 %v24, %v115
    %v117 = vand.u32 %v116, 4294901760
    %v118 = vsub.f32 %v116, %v117
    %v119 = vand.u32 %v118, 4294901760
    %120 = vmatpush.msra.mxu0 %v119
    %v121 = vand.u32 %v23, 4294901760
    %v122 = vsub.f32 %v23, %v121
    %v123 = vand.u32 %v122, 4294901760
    %v124 = vsub.f32 %v122, %v123
    %v125 = vand.u32 %v124, 4294901760
    %126 = vmatpush.msra.mxu0 %v125
    %v127 = vand.u32 %v22, 4294901760
    %v128 = vsub.f32 %v22, %v127
    %v129 = vand.u32 %v128, 4294901760
    %v130 = vsub.f32 %v128, %v129
    %v131 = vand.u32 %v130, 4294901760
    %132 = vmatpush.msra.mxu0 %v131
    %v133 = vand.u32 %v21, 4294901760
    %v134 = vsub.f32 %v21, %v133
    %v135 = vand.u32 %v134, 4294901760
    %v136 = vsub.f32 %v134, %v135
    %v137 = vand.u32 %v136, 4294901760
    %138 = vmatpush.msra.mxu0 %v137
    %v139 = vand.u32 %v20, 4294901760
    %v140 = vsub.f32 %v20, %v139
    %v141 = vand.u32 %v140, 4294901760
    %v142 = vsub.f32 %v140, %v141
    %v143 = vand.u32 %v142, 4294901760
    %144 = vmatpush.msra.mxu0 %v143
    %v145 = vand.u32 %v19, 4294901760
    %v146 = vsub.f32 %v19, %v145
    %v147 = vand.u32 %v146, 4294901760
    %v148 = vsub.f32 %v146, %v147
    %v149 = vand.u32 %v148, 4294901760
    %150 = vmatpush.msra.mxu0 %v149
    %v151 = vand.u32 %v18, 4294901760
    %v152 = vsub.f32 %v18, %v151
    %v153 = vand.u32 %v152, 4294901760
    %v154 = vsub.f32 %v152, %v153
    %v155 = vand.u32 %v154, 4294901760
    %156 = vmatpush.msra.mxu0 %v155
    %v157 = vand.u32 %v17, 4294901760
    %v158 = vsub.f32 %v17, %v157
    %v159 = vand.u32 %v158, 4294901760
    %v160 = vsub.f32 %v158, %v159
    %v161 = vand.u32 %v160, 4294901760
    %162 = vmatpush.msra.mxu0 %v161
    %v163 = vand.u32 %v16, 4294901760
    %v164 = vsub.f32 %v16, %v163
    %v165 = vand.u32 %v164, 4294901760
    %v166 = vsub.f32 %v164, %v165
    %v167 = vand.u32 %v166, 4294901760
    %168 = vmatpush.msra.mxu0 %v167
    %v169 = vand.u32 %v15, 4294901760
    %v170 = vsub.f32 %v15, %v169
    %v171 = vand.u32 %v170, 4294901760
    %v172 = vsub.f32 %v170, %v171
    %v173 = vand.u32 %v172, 4294901760
    %174 = vmatpush.msra.mxu0 %v173
    %v175 = vand.u32 %v14, 4294901760
    %v176 = vsub.f32 %v14, %v175
    %v177 = vand.u32 %v176, 4294901760
    %v178 = vsub.f32 %v176, %v177
    %v179 = vand.u32 %v178, 4294901760
    %180 = vmatpush.msra.mxu0 %v179
    %v181 = vand.u32 %v13, 4294901760
    %v182 = vsub.f32 %v13, %v181
    %v183 = vand.u32 %v182, 4294901760
    %v184 = vsub.f32 %v182, %v183
    %v185 = vand.u32 %v184, 4294901760
    %186 = vmatpush.msra.mxu0 %v185
    %v187 = vand.u32 %v46, 4294901760
    %188 = vmatmul.f32.gmra.mxu0 %v187
    %v189 = vpop.f32.mrf.mxu0
    %v190 = vadd.f32 %v89, %v189
    %191 = vdwg.mxu0
    %v192 = vand.u32 %v28, 4294901760
    %v193 = vsub.f32 %v28, %v192
    %194 = vmatpush.msra.mxu0 %v193
    %v195 = vand.u32 %v27, 4294901760
    %v196 = vsub.f32 %v27, %v195
    %197 = vmatpush.msra.mxu0 %v196
    %v198 = vand.u32 %v26, 4294901760
    %v199 = vsub.f32 %v26, %v198
    %200 = vmatpush.msra.mxu0 %v199
    %v201 = vand.u32 %v25, 4294901760
    %v202 = vsub.f32 %v25, %v201
    %203 = vmatpush.msra.mxu0 %v202
    %v204 = vand.u32 %v24, 4294901760
    %v205 = vsub.f32 %v24, %v204
    %206 = vmatpush.msra.mxu0 %v205
    %v207 = vand.u32 %v23, 4294901760
    %v208 = vsub.f32 %v23, %v207
    %209 = vmatpush.msra.mxu0 %v208
    %v210 = vand.u32 %v22, 4294901760
    %v211 = vsub.f32 %v22, %v210
    %212 = vmatpush.msra.mxu0 %v211
    %v213 = vand.u32 %v21, 4294901760
    %v214 = vsub.f32 %v21, %v213
    %215 = vmatpush.msra.mxu0 %v214
    %v216 = vand.u32 %v20, 4294901760
    %v217 = vsub.f32 %v20, %v216
    %218 = vmatpush.msra.mxu0 %v217
    %v219 = vand.u32 %v19, 4294901760
    %v220 = vsub.f32 %v19, %v219
    %221 = vmatpush.msra.mxu0 %v220
    %v222 = vand.u32 %v18, 4294901760
    %v223 = vsub.f32 %v18, %v222
    %224 = vmatpush.msra.mxu0 %v223
    %v225 = vand.u32 %v17, 4294901760
    %v226 = vsub.f32 %v17, %v225
    %227 = vmatpush.msra.mxu0 %v226
    %v228 = vand.u32 %v16, 4294901760
    %v229 = vsub.f32 %v16, %v228
    %230 = vmatpush.msra.mxu0 %v229
    %v231 = vand.u32 %v15, 4294901760
    %v232 = vsub.f32 %v15, %v231
    %233 = vmatpush.msra.mxu0 %v232
    %v234 = vand.u32 %v14, 4294901760
    %v235 = vsub.f32 %v14, %v234
    %236 = vmatpush.msra.mxu0 %v235
    %v237 = vand.u32 %v13, 4294901760
    %v238 = vsub.f32 %v13, %v237
    %239 = vmatpush.msra.mxu0 %v238
    %v240 = vand.u32 %v46, 4294901760
    %v241 = vsub.f32 %v46, %v240
    %242 = vmatmul.f32.gmra.mxu0 %v241
    %v243 = vpop.f32.mrf.mxu0
    %v244 = vadd.f32 %v190, %v243
    %245 = vdwg.mxu0
    %v246 = vand.u32 %v28, 4294901760
    %247 = vmatpush.msra.mxu0 %v246
    %v248 = vand.u32 %v27, 4294901760
    %249 = vmatpush.msra.mxu0 %v248
    %v250 = vand.u32 %v26, 4294901760
    %251 = vmatpush.msra.mxu0 %v250
    %v252 = vand.u32 %v25, 4294901760
    %253 = vmatpush.msra.mxu0 %v252
    %v254 = vand.u32 %v24, 4294901760
    %255 = vmatpush.msra.mxu0 %v254
    %v256 = vand.u32 %v23, 4294901760
    %257 = vmatpush.msra.mxu0 %v256
    %v258 = vand.u32 %v22, 4294901760
    %259 = vmatpush.msra.mxu0 %v258
    %v260 = vand.u32 %v21, 4294901760
    %261 = vmatpush.msra.mxu0 %v260
    %v262 = vand.u32 %v20, 4294901760
    %263 = vmatpush.msra.mxu0 %v262
    %v264 = vand.u32 %v19, 4294901760
    %265 = vmatpush.msra.mxu0 %v264
    %v266 = vand.u32 %v18, 4294901760
    %267 = vmatpush.msra.mxu0 %v266
    %v268 = vand.u32 %v17, 4294901760
    %269 = vmatpush.msra.mxu0 %v268
    %v270 = vand.u32 %v16, 4294901760
    %271 = vmatpush.msra.mxu0 %v270
    %v272 = vand.u32 %v15, 4294901760
    %273 = vmatpush.msra.mxu0 %v272
    %v274 = vand.u32 %v14, 4294901760
    %275 = vmatpush.msra.mxu0 %v274
    %v276 = vand.u32 %v13, 4294901760
    %277 = vmatpush.msra.mxu0 %v276
    %v278 = vand.u32 %v46, 4294901760
    %v279 = vsub.f32 %v46, %v278
    %v280 = vand.u32 %v279, 4294901760
    %281 = vmatmul.f32.gmra.mxu0 %v280
    %v282 = vpop.f32.mrf.mxu0
    %v283 = vadd.f32 %v244, %v282
    %284 = vdwg.mxu0
    %v285 = vand.u32 %v28, 4294901760
    %v286 = vsub.f32 %v28, %v285
    %v287 = vand.u32 %v286, 4294901760
    %288 = vmatpush.msra.mxu0 %v287
    %v289 = vand.u32 %v27, 4294901760
    %v290 = vsub.f32 %v27, %v289
    %v291 = vand.u32 %v290, 4294901760
    %292 = vmatpush.msra.mxu0 %v291
    %v293 = vand.u32 %v26, 4294901760
    %v294 = vsub.f32 %v26, %v293
    %v295 = vand.u32 %v294, 4294901760
    %296 = vmatpush.msra.mxu0 %v295
    %v297 = vand.u32 %v25, 4294901760
    %v298 = vsub.f32 %v25, %v297
    %v299 = vand.u32 %v298, 4294901760
    %300 = vmatpush.msra.mxu0 %v299
    %v301 = vand.u32 %v24, 4294901760
    %v302 = vsub.f32 %v24, %v301
    %v303 = vand.u32 %v302, 4294901760
    %304 = vmatpush.msra.mxu0 %v303
    %v305 = vand.u32 %v23, 4294901760
    %v306 = vsub.f32 %v23, %v305
    %v307 = vand.u32 %v306, 4294901760
    %308 = vmatpush.msra.mxu0 %v307
    %v309 = vand.u32 %v22, 4294901760
    %v310 = vsub.f32 %v22, %v309
    %v311 = vand.u32 %v310, 4294901760
    %312 = vmatpush.msra.mxu0 %v311
    %v313 = vand.u32 %v21, 4294901760
    %v314 = vsub.f32 %v21, %v313
    %v315 = vand.u32 %v314, 4294901760
    %316 = vmatpush.msra.mxu0 %v315
    %v317 = vand.u32 %v20, 4294901760
    %v318 = vsub.f32 %v20, %v317
    %v319 = vand.u32 %v318, 4294901760
    %320 = vmatpush.msra.mxu0 %v319
    %v321 = vand.u32 %v19, 4294901760
    %v322 = vsub.f32 %v19, %v321
    %v323 = vand.u32 %v322, 4294901760
    %324 = vmatpush.msra.mxu0 %v323
    %v325 = vand.u32 %v18, 4294901760
    %v326 = vsub.f32 %v18, %v325
    %v327 = vand.u32 %v326, 4294901760
    %328 = vmatpush.msra.mxu0 %v327
    %v329 = vand.u32 %v17, 4294901760
    %v330 = vsub.f32 %v17, %v329
    %v331 = vand.u32 %v330, 4294901760
    %332 = vmatpush.msra.mxu0 %v331
    %v333 = vand.u32 %v16, 4294901760
    %v334 = vsub.f32 %v16, %v333
    %v335 = vand.u32 %v334, 4294901760
    %336 = vmatpush.msra.mxu0 %v335
    %v337 = vand.u32 %v15, 4294901760
    %v338 = vsub.f32 %v15, %v337
    %v339 = vand.u32 %v338, 4294901760
    %340 = vmatpush.msra.mxu0 %v339
    %v341 = vand.u32 %v14, 4294901760
    %v342 = vsub.f32 %v14, %v341
    %v343 = vand.u32 %v342, 4294901760
    %344 = vmatpush.msra.mxu0 %v343
    %v345 = vand.u32 %v13, 4294901760
    %v346 = vsub.f32 %v13, %v345
    %v347 = vand.u32 %v346, 4294901760
    %348 = vmatpush.msra.mxu0 %v347
    %v349 = vand.u32 %v46, 4294901760
    %350 = vmatmul.f32.gmra.mxu0 %v349
    %v351 = vpop.f32.mrf.mxu0
    %v352 = vadd.f32 %v283, %v351
    %353 = vdwg.mxu0
    %v354 = vand.u32 %v28, 4294901760
    %355 = vmatpush.msra.mxu0 %v354
    %v356 = vand.u32 %v27, 4294901760
    %357 = vmatpush.msra.mxu0 %v356
    %v358 = vand.u32 %v26, 4294901760
    %359 = vmatpush.msra.mxu0 %v358
    %v360 = vand.u32 %v25, 4294901760
    %361 = vmatpush.msra.mxu0 %v360
    %v362 = vand.u32 %v24, 4294901760
    %363 = vmatpush.msra.mxu0 %v362
    %v364 = vand.u32 %v23, 4294901760
    %365 = vmatpush.msra.mxu0 %v364
    %v366 = vand.u32 %v22, 4294901760
    %367 = vmatpush.msra.mxu0 %v366
    %v368 = vand.u32 %v21, 4294901760
    %369 = vmatpush.msra.mxu0 %v368
    %v370 = vand.u32 %v20, 4294901760
    %371 = vmatpush.msra.mxu0 %v370
    %v372 = vand.u32 %v19, 4294901760
    %373 = vmatpush.msra.mxu0 %v372
    %v374 = vand.u32 %v18, 4294901760
    %375 = vmatpush.msra.mxu0 %v374
    %v376 = vand.u32 %v17, 4294901760
    %377 = vmatpush.msra.mxu0 %v376
    %v378 = vand.u32 %v16, 4294901760
    %379 = vmatpush.msra.mxu0 %v378
    %v380 = vand.u32 %v15, 4294901760
    %381 = vmatpush.msra.mxu0 %v380
    %v382 = vand.u32 %v14, 4294901760
    %383 = vmatpush.msra.mxu0 %v382
    %v384 = vand.u32 %v13, 4294901760
    %385 = vmatpush.msra.mxu0 %v384
    %v386 = vand.u32 %v46, 4294901760
    %387 = vmatmul.f32.gmra.mxu0 %v386
    %v388 = vpop.f32.mrf.mxu0
    %v389 = vadd.f32 %v352, %v388
    %390 = vdwg.mxu0
    %v391 = vand.u32 %v44, 4294901760
    %392 = vmatpush.msra.mxu0 %v391
    %v393 = vand.u32 %v43, 4294901760
    %394 = vmatpush.msra.mxu0 %v393
    %v395 = vand.u32 %v42, 4294901760
    %396 = vmatpush.msra.mxu0 %v395
    %v397 = vand.u32 %v41, 4294901760
    %398 = vmatpush.msra.mxu0 %v397
    %v399 = vand.u32 %v40, 4294901760
    %400 = vmatpush.msra.mxu0 %v399
    %v401 = vand.u32 %v39, 4294901760
    %402 = vmatpush.msra.mxu0 %v401
    %v403 = vand.u32 %v38, 4294901760
    %404 = vmatpush.msra.mxu0 %v403
    %v405 = vand.u32 %v37, 4294901760
    %406 = vmatpush.msra.mxu0 %v405
    %v407 = vand.u32 %v36, 4294901760
    %408 = vmatpush.msra.mxu0 %v407
    %v409 = vand.u32 %v35, 4294901760
    %410 = vmatpush.msra.mxu0 %v409
    %v411 = vand.u32 %v34, 4294901760
    %412 = vmatpush.msra.mxu0 %v411
    %v413 = vand.u32 %v33, 4294901760
    %414 = vmatpush.msra.mxu0 %v413
    %v415 = vand.u32 %v32, 4294901760
    %416 = vmatpush.msra.mxu0 %v415
    %v417 = vand.u32 %v31, 4294901760
    %418 = vmatpush.msra.mxu0 %v417
    %v419 = vand.u32 %v30, 4294901760
    %420 = vmatpush.msra.mxu0 %v419
    %v421 = vand.u32 %v29, 4294901760
    %422 = vmatpush.msra.mxu0 %v421
    %v423 = vand.u32 %v47, 4294901760
    %v424 = vsub.f32 %v47, %v423
    %v425 = vand.u32 %v424, 4294901760
    %v426 = vsub.f32 %v424, %v425
    %v427 = vand.u32 %v426, 4294901760
    %428 = vmatmul.f32.gmra.mxu0 %v427
    %v429 = vpop.f32.mrf.mxu0
    %v430 = vadd.f32 %v389, %v429
    %431 = vdwg.mxu0
    %v432 = vand.u32 %v44, 4294901760
    %v433 = vsub.f32 %v44, %v432
    %v434 = vand.u32 %v433, 4294901760
    %v435 = vsub.f32 %v433, %v434
    %v436 = vand.u32 %v435, 4294901760
    %437 = vmatpush.msra.mxu0 %v436
    %v438 = vand.u32 %v43, 4294901760
    %v439 = vsub.f32 %v43, %v438
    %v440 = vand.u32 %v439, 4294901760
    %v441 = vsub.f32 %v439, %v440
    %v442 = vand.u32 %v441, 4294901760
    %443 = vmatpush.msra.mxu0 %v442
    %v444 = vand.u32 %v42, 4294901760
    %v445 = vsub.f32 %v42, %v444
    %v446 = vand.u32 %v445, 4294901760
    %v447 = vsub.f32 %v445, %v446
    %v448 = vand.u32 %v447, 4294901760
    %449 = vmatpush.msra.mxu0 %v448
    %v450 = vand.u32 %v41, 4294901760
    %v451 = vsub.f32 %v41, %v450
    %v452 = vand.u32 %v451, 4294901760
    %v453 = vsub.f32 %v451, %v452
    %v454 = vand.u32 %v453, 4294901760
    %455 = vmatpush.msra.mxu0 %v454
    %v456 = vand.u32 %v40, 4294901760
    %v457 = vsub.f32 %v40, %v456
    %v458 = vand.u32 %v457, 4294901760
    %v459 = vsub.f32 %v457, %v458
    %v460 = vand.u32 %v459, 4294901760
    %461 = vmatpush.msra.mxu0 %v460
    %v462 = vand.u32 %v39, 4294901760
    %v463 = vsub.f32 %v39, %v462
    %v464 = vand.u32 %v463, 4294901760
    %v465 = vsub.f32 %v463, %v464
    %v466 = vand.u32 %v465, 4294901760
    %467 = vmatpush.msra.mxu0 %v466
    %v468 = vand.u32 %v38, 4294901760
    %v469 = vsub.f32 %v38, %v468
    %v470 = vand.u32 %v469, 4294901760
    %v471 = vsub.f32 %v469, %v470
    %v472 = vand.u32 %v471, 4294901760
    %473 = vmatpush.msra.mxu0 %v472
    %v474 = vand.u32 %v37, 4294901760
    %v475 = vsub.f32 %v37, %v474
    %v476 = vand.u32 %v475, 4294901760
    %v477 = vsub.f32 %v475, %v476
    %v478 = vand.u32 %v477, 4294901760
    %479 = vmatpush.msra.mxu0 %v478
    %v480 = vand.u32 %v36, 4294901760
    %v481 = vsub.f32 %v36, %v480
    %v482 = vand.u32 %v481, 4294901760
    %v483 = vsub.f32 %v481, %v482
    %v484 = vand.u32 %v483, 4294901760
    %485 = vmatpush.msra.mxu0 %v484
    %v486 = vand.u32 %v35, 4294901760
    %v487 = vsub.f32 %v35, %v486
    %v488 = vand.u32 %v487, 4294901760
    %v489 = vsub.f32 %v487, %v488
    %v490 = vand.u32 %v489, 4294901760
    %491 = vmatpush.msra.mxu0 %v490
    %v492 = vand.u32 %v34, 4294901760
    %v493 = vsub.f32 %v34, %v492
    %v494 = vand.u32 %v493, 4294901760
    %v495 = vsub.f32 %v493, %v494
    %v496 = vand.u32 %v495, 4294901760
    %497 = vmatpush.msra.mxu0 %v496
    %v498 = vand.u32 %v33, 4294901760
    %v499 = vsub.f32 %v33, %v498
    %v500 = vand.u32 %v499, 4294901760
    %v501 = vsub.f32 %v499, %v500
    %v502 = vand.u32 %v501, 4294901760
    %503 = vmatpush.msra.mxu0 %v502
    %v504 = vand.u32 %v32, 4294901760
    %v505 = vsub.f32 %v32, %v504
    %v506 = vand.u32 %v505, 4294901760
    %v507 = vsub.f32 %v505, %v506
    %v508 = vand.u32 %v507, 4294901760
    %509 = vmatpush.msra.mxu0 %v508
    %v510 = vand.u32 %v31, 4294901760
    %v511 = vsub.f32 %v31, %v510
    %v512 = vand.u32 %v511, 4294901760
    %v513 = vsub.f32 %v511, %v512
    %v514 = vand.u32 %v513, 4294901760
    %515 = vmatpush.msra.mxu0 %v514
    %v516 = vand.u32 %v30, 4294901760
    %v517 = vsub.f32 %v30, %v516
    %v518 = vand.u32 %v517, 4294901760
    %v519 = vsub.f32 %v517, %v518
    %v520 = vand.u32 %v519, 4294901760
    %521 = vmatpush.msra.mxu0 %v520
    %v522 = vand.u32 %v29, 4294901760
    %v523 = vsub.f32 %v29, %v522
    %v524 = vand.u32 %v523, 4294901760
    %v525 = vsub.f32 %v523, %v524
    %v526 = vand.u32 %v525, 4294901760
    %527 = vmatpush.msra.mxu0 %v526
    %v528 = vand.u32 %v47, 4294901760
    %529 = vmatmul.f32.gmra.mxu0 %v528
    %v530 = vpop.f32.mrf.mxu0
    %v531 = vadd.f32 %v430, %v530
    %532 = vdwg.mxu0
    %v533 = vand.u32 %v44, 4294901760
    %v534 = vsub.f32 %v44, %v533
    %535 = vmatpush.msra.mxu0 %v534
    %v536 = vand.u32 %v43, 4294901760
    %v537 = vsub.f32 %v43, %v536
    %538 = vmatpush.msra.mxu0 %v537
    %v539 = vand.u32 %v42, 4294901760
    %v540 = vsub.f32 %v42, %v539
    %541 = vmatpush.msra.mxu0 %v540
    %v542 = vand.u32 %v41, 4294901760
    %v543 = vsub.f32 %v41, %v542
    %544 = vmatpush.msra.mxu0 %v543
    %v545 = vand.u32 %v40, 4294901760
    %v546 = vsub.f32 %v40, %v545
    %547 = vmatpush.msra.mxu0 %v546
    %v548 = vand.u32 %v39, 4294901760
    %v549 = vsub.f32 %v39, %v548
    %550 = vmatpush.msra.mxu0 %v549
    %v551 = vand.u32 %v38, 4294901760
    %v552 = vsub.f32 %v38, %v551
    %553 = vmatpush.msra.mxu0 %v552
    %v554 = vand.u32 %v37, 4294901760
    %v555 = vsub.f32 %v37, %v554
    %556 = vmatpush.msra.mxu0 %v555
    %v557 = vand.u32 %v36, 4294901760
    %v558 = vsub.f32 %v36, %v557
    %559 = vmatpush.msra.mxu0 %v558
    %v560 = vand.u32 %v35, 4294901760
    %v561 = vsub.f32 %v35, %v560
    %562 = vmatpush.msra.mxu0 %v561
    %v563 = vand.u32 %v34, 4294901760
    %v564 = vsub.f32 %v34, %v563
    %565 = vmatpush.msra.mxu0 %v564
    %v566 = vand.u32 %v33, 4294901760
    %v567 = vsub.f32 %v33, %v566
    %568 = vmatpush.msra.mxu0 %v567
    %v569 = vand.u32 %v32, 4294901760
    %v570 = vsub.f32 %v32, %v569
    %571 = vmatpush.msra.mxu0 %v570
    %v572 = vand.u32 %v31, 4294901760
    %v573 = vsub.f32 %v31, %v572
    %574 = vmatpush.msra.mxu0 %v573
    %v575 = vand.u32 %v30, 4294901760
    %v576 = vsub.f32 %v30, %v575
    %577 = vmatpush.msra.mxu0 %v576
    %v578 = vand.u32 %v29, 4294901760
    %v579 = vsub.f32 %v29, %v578
    %580 = vmatpush.msra.mxu0 %v579
    %v581 = vand.u32 %v47, 4294901760
    %v582 = vsub.f32 %v47, %v581
    %583 = vmatmul.f32.gmra.mxu0 %v582
    %v584 = vpop.f32.mrf.mxu0
    %v585 = vadd.f32 %v531, %v584
    %586 = vdwg.mxu0
    %v587 = vand.u32 %v44, 4294901760
    %588 = vmatpush.msra.mxu0 %v587
    %v589 = vand.u32 %v43, 4294901760
    %590 = vmatpush.msra.mxu0 %v589
    %v591 = vand.u32 %v42, 4294901760
    %592 = vmatpush.msra.mxu0 %v591
    %v593 = vand.u32 %v41, 4294901760
    %594 = vmatpush.msra.mxu0 %v593
    %v595 = vand.u32 %v40, 4294901760
    %596 = vmatpush.msra.mxu0 %v595
    %v597 = vand.u32 %v39, 4294901760
    %598 = vmatpush.msra.mxu0 %v597
    %v599 = vand.u32 %v38, 4294901760
    %600 = vmatpush.msra.mxu0 %v599
    %v601 = vand.u32 %v37, 4294901760
    %602 = vmatpush.msra.mxu0 %v601
    %v603 = vand.u32 %v36, 4294901760
    %604 = vmatpush.msra.mxu0 %v603
    %v605 = vand.u32 %v35, 4294901760
    %606 = vmatpush.msra.mxu0 %v605
    %v607 = vand.u32 %v34, 4294901760
    %608 = vmatpush.msra.mxu0 %v607
    %v609 = vand.u32 %v33, 4294901760
    %610 = vmatpush.msra.mxu0 %v609
    %v611 = vand.u32 %v32, 4294901760
    %612 = vmatpush.msra.mxu0 %v611
    %v613 = vand.u32 %v31, 4294901760
    %614 = vmatpush.msra.mxu0 %v613
    %v615 = vand.u32 %v30, 4294901760
    %616 = vmatpush.msra.mxu0 %v615
    %v617 = vand.u32 %v29, 4294901760
    %618 = vmatpush.msra.mxu0 %v617
    %v619 = vand.u32 %v47, 4294901760
    %v620 = vsub.f32 %v47, %v619
    %v621 = vand.u32 %v620, 4294901760
    %622 = vmatmul.f32.gmra.mxu0 %v621
    %v623 = vpop.f32.mrf.mxu0
    %v624 = vadd.f32 %v585, %v623
    %625 = vdwg.mxu0
    %v626 = vand.u32 %v44, 4294901760
    %v627 = vsub.f32 %v44, %v626
    %v628 = vand.u32 %v627, 4294901760
    %629 = vmatpush.msra.mxu0 %v628
    %v630 = vand.u32 %v43, 4294901760
    %v631 = vsub.f32 %v43, %v630
    %v632 = vand.u32 %v631, 4294901760
    %633 = vmatpush.msra.mxu0 %v632
    %v634 = vand.u32 %v42, 4294901760
    %v635 = vsub.f32 %v42, %v634
    %v636 = vand.u32 %v635, 4294901760
    %637 = vmatpush.msra.mxu0 %v636
    %v638 = vand.u32 %v41, 4294901760
    %v639 = vsub.f32 %v41, %v638
    %v640 = vand.u32 %v639, 4294901760
    %641 = vmatpush.msra.mxu0 %v640
    %v642 = vand.u32 %v40, 4294901760
    %v643 = vsub.f32 %v40, %v642
    %v644 = vand.u32 %v643, 4294901760
    %645 = vmatpush.msra.mxu0 %v644
    %v646 = vand.u32 %v39, 4294901760
    %v647 = vsub.f32 %v39, %v646
    %v648 = vand.u32 %v647, 4294901760
    %649 = vmatpush.msra.mxu0 %v648
    %v650 = vand.u32 %v38, 4294901760
    %v651 = vsub.f32 %v38, %v650
    %v652 = vand.u32 %v651, 4294901760
    %653 = vmatpush.msra.mxu0 %v652
    %v654 = vand.u32 %v37, 4294901760
    %v655 = vsub.f32 %v37, %v654
    %v656 = vand.u32 %v655, 4294901760
    %657 = vmatpush.msra.mxu0 %v656
    %v658 = vand.u32 %v36, 4294901760
    %v659 = vsub.f32 %v36, %v658
    %v660 = vand.u32 %v659, 4294901760
    %661 = vmatpush.msra.mxu0 %v660
    %v662 = vand.u32 %v35, 4294901760
    %v663 = vsub.f32 %v35, %v662
    %v664 = vand.u32 %v663, 4294901760
    %665 = vmatpush.msra.mxu0 %v664
    %v666 = vand.u32 %v34, 4294901760
    %v667 = vsub.f32 %v34, %v666
    %v668 = vand.u32 %v667, 4294901760
    %669 = vmatpush.msra.mxu0 %v668
    %v670 = vand.u32 %v33, 4294901760
    %v671 = vsub.f32 %v33, %v670
    %v672 = vand.u32 %v671, 4294901760
    %673 = vmatpush.msra.mxu0 %v672
    %v674 = vand.u32 %v32, 4294901760
    %v675 = vsub.f32 %v32, %v674
    %v676 = vand.u32 %v675, 4294901760
    %677 = vmatpush.msra.mxu0 %v676
    %v678 = vand.u32 %v31, 4294901760
    %v679 = vsub.f32 %v31, %v678
    %v680 = vand.u32 %v679, 4294901760
    %681 = vmatpush.msra.mxu0 %v680
    %v682 = vand.u32 %v30, 4294901760
    %v683 = vsub.f32 %v30, %v682
    %v684 = vand.u32 %v683, 4294901760
    %685 = vmatpush.msra.mxu0 %v684
    %v686 = vand.u32 %v29, 4294901760
    %v687 = vsub.f32 %v29, %v686
    %v688 = vand.u32 %v687, 4294901760
    %689 = vmatpush.msra.mxu0 %v688
    %v690 = vand.u32 %v47, 4294901760
    %691 = vmatmul.f32.gmra.mxu0 %v690
    %v692 = vpop.f32.mrf.mxu0
    %v693 = vadd.f32 %v624, %v692
    %694 = vdwg.mxu0
    %v695 = vand.u32 %v44, 4294901760
    %696 = vmatpush.msra.mxu0 %v695
    %v697 = vand.u32 %v43, 4294901760
    %698 = vmatpush.msra.mxu0 %v697
    %v699 = vand.u32 %v42, 4294901760
    %700 = vmatpush.msra.mxu0 %v699
    %v701 = vand.u32 %v41, 4294901760
    %702 = vmatpush.msra.mxu0 %v701
    %v703 = vand.u32 %v40, 4294901760
    %704 = vmatpush.msra.mxu0 %v703
    %v705 = vand.u32 %v39, 4294901760
    %706 = vmatpush.msra.mxu0 %v705
    %v707 = vand.u32 %v38, 4294901760
    %708 = vmatpush.msra.mxu0 %v707
    %v709 = vand.u32 %v37, 4294901760
    %710 = vmatpush.msra.mxu0 %v709
    %v711 = vand.u32 %v36, 4294901760
    %712 = vmatpush.msra.mxu0 %v711
    %v713 = vand.u32 %v35, 4294901760
    %714 = vmatpush.msra.mxu0 %v713
    %v715 = vand.u32 %v34, 4294901760
    %716 = vmatpush.msra.mxu0 %v715
    %v717 = vand.u32 %v33, 4294901760
    %718 = vmatpush.msra.mxu0 %v717
    %v719 = vand.u32 %v32, 4294901760
    %720 = vmatpush.msra.mxu0 %v719
    %v721 = vand.u32 %v31, 4294901760
    %722 = vmatpush.msra.mxu0 %v721
    %v723 = vand.u32 %v30, 4294901760
    %724 = vmatpush.msra.mxu0 %v723
    %v725 = vand.u32 %v29, 4294901760
    %726 = vmatpush.msra.mxu0 %v725
    %v727 = vand.u32 %v47, 4294901760
    %728 = vmatmul.f32.gmra.mxu0 %v727
    %v729 = vpop.f32.mrf.mxu0
    %v730 = vadd.f32 %v693, %v729
    %731 = vdwg.mxu0
    %vm732 = vcmask 516096
    %733 = vst.msk [vmem:[#allocation2] sm:$0x1] %vm732, %v730
    // Predicated region
    $region10: #{tpu_custom_call.1} parent=1 // pred_check
      _
    $region11: #{tpu_custom_call.1} parent=1 // pred_check_branch
      %735 = sbr.rel (0) target = $region13
    $region12: #{tpu_custom_call.1} parent=1 // pred_region
      %737 = vsyncadd [#allocation3], 0
      %s739 = sshll.u32 [#allocation2], 4
      %s740 = int_to_ptr.vmem [resolvable:$true] %s739
      %s741 = sshll.u32 %s2, 4
      %s742 = int_to_ptr.hbm [resolvable:$true] %s741
      %744 = dma.vmem_to_hbm [thread:$0]  %s740, 16, %s742, [#allocation3]
    $region13: #{tpu_custom_call.1} parent=1 // pred_fallthru
      _
    // Predicated region
    $region14: #{tpu_custom_call.1} parent=1 // pred_check
      _
    $region15: #{tpu_custom_call.1} parent=1 // pred_check_branch
      %746 = sbr.rel (0) target = $region17
    $region16: #{tpu_custom_call.1} parent=1 // pred_region
      %748 = dma.done [#allocation3], 16
    $region17: #{tpu_custom_call.1} parent=1 // pred_fallthru
      _
    %749 = vsyncpa [#allocation3], 1

</llo_original>
